<compile_context>
chip_gen: v7x
topology: tpu7x:2x2x1
jax: 0.10.0
libtpu: 0.0.40
codegen_flags: <defaults>
</compile_context>

<pallas_src>
import functools

import jax
import jax.numpy as jnp
from jax.experimental import pallas as pl
from jax.experimental.pallas import tpu as pltpu

NEG_SLOPE = 0.01          # F.leaky_relu default negative slope
HIDDEN = 7                # hidden width of the PyTorch module
OUT_DIM = 2               # (ctg, constraint)
PAD = 8                   # sublane-padded layer width used inside the kernel
N_LAYERS = 4
P_ROWS = N_LAYERS * PAD   # 32 rows: 8 per layer
DEFAULT_TILE_B = 16384    # batch-tile cap on the lane axis (sweep 8192-32768)


def _cdiv(a, b):
    return -(-a // b)


def _round_up(n, m):
    return _cdiv(n, m) * m


def _leaky_relu(x):
    return jnp.where(x > 0, x, NEG_SLOPE * x)


def _mlp_kernel(p_ref, xuT_ref, outT_ref):
    """One batch tile, batch on the lane axis.

    p_ref    : (32, 8)  packed weights (+ biases folded via ones-carrier row);
                        constant index_map -> VMEM-resident across grid steps.
    xuT_ref  : (x_dim + u_dim + 1, tile)  feature-major inputs, last row = 1.
    outT_ref : (2, tile)                  lane-dense output store.
    """
    in_aug = xuT_ref.shape[0]               # x_dim + u_dim + 1 (ones row)
    p = p_ref[...]

    # Layer 1: W1 | b1 packed in cols 0:in_aug; ones-row of the input supplies
    # the bias term, and slab row 7 regenerates the carrier (=1) for layer 2.
    h = _leaky_relu(
        jnp.dot(p[0:PAD, 0:in_aug], xuT_ref[...],
                preferred_element_type=jnp.float32))

    # Layers 2..4: clean (8, 8) @ (8, tile) dots; col 7 is the bias (multiplied
    # by the carrier row h[7] == 1), row 7 keeps the carrier alive.
    for l in range(1, N_LAYERS):
        w = p[PAD * l:PAD * (l + 1), :]
        h = _leaky_relu(jnp.dot(w, h, preferred_element_type=jnp.float32))

    outT_ref[...] = h[0:OUT_DIM, :]          # lane-dense (2, tile) store


def init_params(key, x_rom_dim, u_dim, hidden_size=HIDDEN):
    """Synthetic init mirroring the PyTorch module.

    Weights in PyTorch convention (fan_out, fan_in) with
    nn.init.kaiming_uniform_ (a=0, leaky_relu): bound = sqrt(2)*sqrt(3/fan_in).
    Biases keep nn.Linear's default U(-1/sqrt(fan_in), 1/sqrt(fan_in)).
    """
    dims = [(hidden_size, x_rom_dim + u_dim),
            (hidden_size, hidden_size),
            (hidden_size, hidden_size),
            (OUT_DIM, hidden_size)]
    params = []
    for fan_out, fan_in in dims:
        key, kw, kb = jax.random.split(key, 3)
        w_bound = float(jnp.sqrt(2.0) * jnp.sqrt(3.0 / fan_in))
        w = jax.random.uniform(kw, (fan_out, fan_in), jnp.float32,
                               -w_bound, w_bound)
        b_bound = 1.0 / float(jnp.sqrt(float(fan_in)))
        b = jax.random.uniform(kb, (fan_out,), jnp.float32, -b_bound, b_bound)
        params.append((w, b))
    return params


def pack_params(params):
    """Pack [(W, b)] into one (32, 8) f32 slab with biases folded in.

    Layer l occupies rows 8l:8l+8. Weight goes in cols 0:fan_in (lane 0
    aligned), the bias in the column that the "ones carrier" occupies in that
    layer's input (col fan_in for layer 1, col 7 afterwards), and slab row
    8l+7 regenerates the carrier so it stays exactly 1 through leaky_relu.
    """
    slab = jnp.zeros((P_ROWS, PAD), jnp.float32)
    for l, (w, b) in enumerate(params):
        w = jnp.asarray(w, jnp.float32)
        b = jnp.asarray(b, jnp.float32)
        fo, fi = w.shape
        assert fo < PAD, "fan_out must leave room for the ones-carrier row"
        bias_col = fi if l == 0 else PAD - 1
        assert bias_col < PAD
        r = PAD * l
        slab = slab.at[r:r + fo, 0:fi].set(w)
        slab = slab.at[r:r + fo, bias_col].set(b)
        slab = slab.at[r + PAD - 1, bias_col].set(1.0)   # carrier row -> 1
    return slab


@functools.partial(jax.jit, static_argnames=("tile_b",))
def net_forward(x_rom_in, u_in, param_slab, tile_b=DEFAULT_TILE_B):
    """Pallas forward pass of `Net`. Returns (ctg, constraint), each (B, 1)."""
    x = x_rom_in.astype(jnp.float32)
    u = u_in.astype(jnp.float32)
    B, x_dim = x.shape
    u_dim = u.shape[1]
    in_aug = x_dim + u_dim + 1                      # + ones row (bias fold)

    # --- tile / grid selection (all Python ints at trace time) --------------
    tile_b = max(int(tile_b), 128)
    groups = _cdiv(B, 128)                          # 128-lane batch groups
    n_steps = max(_cdiv(groups * 128, tile_b), 1)
    if groups >= 2:
        n_steps = max(n_steps, 2)                   # let v7x megacore engage
        if n_steps % 2 and n_steps < groups:
            n_steps += 1                            # prefer an even split
    tile = _cdiv(groups, n_steps) * 128             # multiple of 128
    padded_b = n_steps * tile                       # waste <= (n_steps-1)*128

    # --- single fused feature-major input (concat + ones row + transpose) ---
    xu_aug = jnp.concatenate([x, u, jnp.ones((B, 1), jnp.float32)], axis=1)
    xuT = jnp.pad(xu_aug.T, ((0, 0), (0, padded_b - B)))   # (in_aug, padded_b)

    outT = pl.pallas_call(
        _mlp_kernel,
        out_shape=jax.ShapeDtypeStruct((OUT_DIM, padded_b), jnp.float32),
        grid_spec=pltpu.PrefetchScalarGridSpec(
            num_scalar_prefetch=0,
            grid=(n_steps,),
            in_specs=[
                # Parameter slab: constant index_map -> fetched once, stays
                # VMEM-resident for every grid step.
                pl.BlockSpec((P_ROWS, PAD), lambda i: (0, 0)),
                pl.BlockSpec((in_aug, tile), lambda i: (0, i)),
            ],
            out_specs=pl.BlockSpec((OUT_DIM, tile), lambda i: (0, i)),
        ),
        compiler_params=pltpu.CompilerParams(
            dimension_semantics=("parallel",),      # megacore sharding on v7x
        ),
    )(param_slab, xuT)

    ctg = outT[0, :B].reshape(-1, 1)
    constraint = outT[1, :B].reshape(-1, 1)
    return ctg, constraint


def net_forward_reference(x_rom_in, u_in, params):
    """Pure-JAX reference matching the PyTorch forward exactly."""
    h = jnp.concatenate([x_rom_in, u_in], axis=1).astype(jnp.float32)
    for w, b in params:
        h = _leaky_relu(h @ w.T + b)
    return h[:, 0:1], h[:, 1:2]


if __name__ == "__main__":
    key = jax.random.PRNGKey(0)
    k_params, k_x, k_u, k_x2, k_u2 = jax.random.split(key, 5)

    # Shapes consistent with the module: 3-dim ROM state, 2-dim control.
    x_rom_dim, u_dim, batch = 3, 2, 8
    params = init_params(k_params, x_rom_dim, u_dim, hidden_size=HIDDEN)
    param_slab = pack_params(params)

    x_rom_in = jax.random.normal(k_x, (batch, x_rom_dim), jnp.float32)
    u_in = jax.random.normal(k_u, (batch, u_dim), jnp.float32)

    ctg, constraint = net_forward(x_rom_in, u_in, param_slab)
    jax.block_until_ready((ctg, constraint))
    assert ctg.shape == (batch, 1) and constraint.shape == (batch, 1)

    ctg_ref, con_ref = net_forward_reference(x_rom_in, u_in, params)
    assert jnp.allclose(ctg, ctg_ref, rtol=1e-4, atol=1e-4)
    assert jnp.allclose(constraint, con_ref, rtol=1e-4, atol=1e-4)

    # Second check: ragged batch that exercises the >=2-step grid and the
    # pad-to-128 (not pad-to-tile) path.
    batch2 = 300
    x2 = jax.random.normal(k_x2, (batch2, x_rom_dim), jnp.float32)
    u2 = jax.random.normal(k_u2, (batch2, u_dim), jnp.float32)
    ctg2, con2 = net_forward(x2, u2, param_slab)
    jax.block_until_ready((ctg2, con2))
    ctg2_ref, con2_ref = net_forward_reference(x2, u2, params)
    assert ctg2.shape == (batch2, 1) and con2.shape == (batch2, 1)
    assert jnp.allclose(ctg2, ctg2_ref, rtol=1e-4, atol=1e-4)
    assert jnp.allclose(con2, con2_ref, rtol=1e-4, atol=1e-4)

    print("KERNEL_OK")
</pallas_src>

<mosaic_0001>
module attributes {stable_mosaic.version = 11 : i64} {
  func.func @_mlp_kernel(%arg0: i32, %arg1: memref<32x8xf32, #tpu.memory_space<vmem>>, %arg2: memref<6x128xf32, #tpu.memory_space<vmem>>, %arg3: memref<2x128xf32, #tpu.memory_space<vmem>>) attributes {dimension_semantics = [#tpu.dimension_semantics<parallel>], iteration_bounds = array<i64: 1>, scalar_prefetch = 0 : i64, scratch_operands = 0 : i64, tpu.core_type = #tpu.core_type<tc>, window_params = [{pipeline_mode = #tpu.pipeline_mode<synchronous>, transform_indices = @transform_0, window_bounds = array<i64: 32, 8>}, {transform_indices = @transform_1, window_bounds = array<i64: 6, 128>}, {transform_indices = @transform_2, window_bounds = array<i64: 2, 128>}]} {
    %c0 = arith.constant 0 : index
    %c0_0 = arith.constant 0 : index
    %0 = vector.load %arg1[%c0, %c0_0] : memref<32x8xf32, #tpu.memory_space<vmem>>, vector<32x8xf32>
    %1 = vector.extract_strided_slice %0 {offsets = [0, 0], sizes = [8, 6], strides = [1, 1]} : vector<32x8xf32> to vector<8x6xf32>
    %c0_1 = arith.constant 0 : index
    %c0_2 = arith.constant 0 : index
    %2 = vector.load %arg2[%c0_1, %c0_2] : memref<6x128xf32, #tpu.memory_space<vmem>>, vector<6x128xf32>
    %cst = arith.constant dense<0.000000e+00> : vector<8x128xf32>
    %3 = tpu.matmul %1, %2, %cst {dimension_numbers = #tpu.dot_dimension_numbers<[1], [0], [0], [1], [0, 0, 1, 1], [], []>} : vector<8x6xf32>, vector<6x128xf32>, vector<8x128xf32> -> vector<8x128xf32>
    %cst_3 = arith.constant 0.000000e+00 : f32
    %4 = vector.broadcast %cst_3 : f32 to vector<8x128xf32>
    %5 = arith.cmpf ogt, %3, %4 : vector<8x128xf32>
    %cst_4 = arith.constant 0.00999999977 : f32
    %6 = vector.broadcast %cst_4 : f32 to vector<8x128xf32>
    %7 = arith.mulf %6, %3 : vector<8x128xf32>
    %8 = arith.select %5, %3, %7 : vector<8x128xi1>, vector<8x128xf32>
    %9 = vector.extract_strided_slice %0 {offsets = [8, 0], sizes = [8, 8], strides = [1, 1]} : vector<32x8xf32> to vector<8x8xf32>
    %cst_5 = arith.constant dense<0.000000e+00> : vector<8x128xf32>
    %10 = tpu.matmul %9, %8, %cst_5 {dimension_numbers = #tpu.dot_dimension_numbers<[1], [0], [0], [1], [0, 0, 1, 1], [], []>} : vector<8x8xf32>, vector<8x128xf32>, vector<8x128xf32> -> vector<8x128xf32>
    %cst_6 = arith.constant 0.000000e+00 : f32
    %11 = vector.broadcast %cst_6 : f32 to vector<8x128xf32>
    %12 = arith.cmpf ogt, %10, %11 : vector<8x128xf32>
    %cst_7 = arith.constant 0.00999999977 : f32
    %13 = vector.broadcast %cst_7 : f32 to vector<8x128xf32>
    %14 = arith.mulf %13, %10 : vector<8x128xf32>
    %15 = arith.select %12, %10, %14 : vector<8x128xi1>, vector<8x128xf32>
    %16 = vector.extract_strided_slice %0 {offsets = [16, 0], sizes = [8, 8], strides = [1, 1]} : vector<32x8xf32> to vector<8x8xf32>
    %cst_8 = arith.constant dense<0.000000e+00> : vector<8x128xf32>
    %17 = tpu.matmul %16, %15, %cst_8 {dimension_numbers = #tpu.dot_dimension_numbers<[1], [0], [0], [1], [0, 0, 1, 1], [], []>} : vector<8x8xf32>, vector<8x128xf32>, vector<8x128xf32> -> vector<8x128xf32>
    %cst_9 = arith.constant 0.000000e+00 : f32
    %18 = vector.broadcast %cst_9 : f32 to vector<8x128xf32>
    %19 = arith.cmpf ogt, %17, %18 : vector<8x128xf32>
    %cst_10 = arith.constant 0.00999999977 : f32
    %20 = vector.broadcast %cst_10 : f32 to vector<8x128xf32>
    %21 = arith.mulf %20, %17 : vector<8x128xf32>
    %22 = arith.select %19, %17, %21 : vector<8x128xi1>, vector<8x128xf32>
    %23 = vector.extract_strided_slice %0 {offsets = [24, 0], sizes = [8, 8], strides = [1, 1]} : vector<32x8xf32> to vector<8x8xf32>
    %cst_11 = arith.constant dense<0.000000e+00> : vector<8x128xf32>
    %24 = tpu.matmul %23, %22, %cst_11 {dimension_numbers = #tpu.dot_dimension_numbers<[1], [0], [0], [1], [0, 0, 1, 1], [], []>} : vector<8x8xf32>, vector<8x128xf32>, vector<8x128xf32> -> vector<8x128xf32>
    %cst_12 = arith.constant 0.000000e+00 : f32
    %25 = vector.broadcast %cst_12 : f32 to vector<8x128xf32>
    %26 = arith.cmpf ogt, %24, %25 : vector<8x128xf32>
    %cst_13 = arith.constant 0.00999999977 : f32
    %27 = vector.broadcast %cst_13 : f32 to vector<8x128xf32>
    %28 = arith.mulf %27, %24 : vector<8x128xf32>
    %29 = arith.select %26, %24, %28 : vector<8x128xi1>, vector<8x128xf32>
    %30 = vector.extract_strided_slice %29 {offsets = [0, 0], sizes = [2, 128], strides = [1, 1]} : vector<8x128xf32> to vector<2x128xf32>
    %c0_14 = arith.constant 0 : index
    %c0_15 = arith.constant 0 : index
    %31 = vector.load %arg3[%c0_14, %c0_15] : memref<2x128xf32, #tpu.memory_space<vmem>>, vector<2x128xf32>
    tpu.vector_store %arg3[%c0_14, %c0_15], %30 {strides = array<i32>} : memref<2x128xf32, #tpu.memory_space<vmem>>, vector<2x128xf32>,
    return
  }
  func.func @transform_0(%arg0: i32) -> (i32, i32) {
    %c0_i32 = arith.constant 0 : i32
    %c0_i32_0 = arith.constant 0 : i32
    %c0_i32_1 = arith.constant 0 : i32
    return %c0_i32, %c0_i32_0 : i32, i32
  }
  func.func @transform_1(%arg0: i32) -> (i32, i32) {
    %c0_i32 = arith.constant 0 : i32
    %c0_i32_0 = arith.constant 0 : i32
    return %c0_i32, %arg0 : i32, i32
  }
  func.func @transform_2(%arg0: i32) -> (i32, i32) {
    %c0_i32 = arith.constant 0 : i32
    %c0_i32_0 = arith.constant 0 : i32
    return %c0_i32, %arg0 : i32, i32
  }
}

</mosaic_0001>

<llo_original>
// kernel: net_forward.1
$region0: #{net_forward.1}
  #allocation0 [shape = 'u32[]', space=smem, size = 0x4, offset = 0x4, fixed_abs, tag = 'smem constant byte address 0x4 - core index']
  #allocation1 [shape = 'u32[144,128]{1,0:T(1,128)}', space=vmem, size = 0x12000, scoped, tag = 'internal scratch']
  %s0 = inlined_call_operand.vmem [shape: f32[32,8], index: 0, kind: input, shape index: {}]
  %s1 = inlined_call_operand.vmem [shape: f32[6,128], index: 1, kind: input, shape index: {}]
  %s2 = inlined_call_operand.vmem [shape: f32[2,128], index: 2, kind: output, shape index: {}]
  %s3 = sld [smem:[#allocation0]]
  $region18: #{net_forward.1} parent=0
    _
  %s5 = ssub.s32 1, %s3
  %s6 = scalar_select 0, %s5, %s3
  // Predicated region
  $region2: #{net_forward.1} parent=0 // pred_check
    _
  $region3: #{net_forward.1} parent=0 // pred_check_branch
    %8 = sbr.rel (0) target = $region5
  $region4: #{net_forward.1} parent=0 // pred_region
    _
  $region5: #{net_forward.1} parent=0 // pred_fallthru
    _
  // Predicated region
  $region6: #{net_forward.1} parent=0 // pred_check
    _
  $region7: #{net_forward.1} parent=0 // pred_check_branch
    %10 = sbr.rel (0) target = $region9
  $region8: #{net_forward.1} parent=0 // pred_region
    _
  $region9: #{net_forward.1} parent=0 // pred_fallthru
    _
  %v11 = vld [vmem:[%s0] sm:$0xff]
  %v12 = vld [vmem:[%s0 + $0x8] sm:$0xff]
  %v13 = vld [vmem:[%s0 + $0x10] sm:$0xff]
  %v14 = vld [vmem:[%s0 + $0x18] sm:$0xff]
  %v15 = vld [vmem:[%s1] sm:$0x3f]
  %vm16 = vcmask 48128
  %v18 = vsel %vm16, %v11, 0
  %vm20 = vcmask 1045504
  %v22 = vsel %vm20, %v15, 0
  %24 = vmatprep.subr.mxu0 0.0
  %25 = vmatpush1.msra.mxu0 %v22
  %26 = vmatprep.subr.mxu0 0.0
  %27 = vmatpush1.msra.mxu0 0.0
  %28 = vmatprep.subr.mxu0 0.0
  %29 = vmatpush1.msra.mxu0 0.0
  %30 = vmatprep.subr.mxu0 0.0
  %31 = vmatpush1.msra.mxu0 0.0
  %32 = vmatprep.subr.mxu0 0.0
  %33 = vmatpush1.msra.mxu0 0.0
  %34 = vmatprep.subr.mxu0 0.0
  %35 = vmatpush1.msra.mxu0 0.0
  %36 = vmatprep.subr.mxu0 0.0
  %37 = vmatpush1.msra.mxu0 0.0
  %38 = vmatprep.subr.mxu0 0.0
  %39 = vmatpush1.msra.mxu0 0.0
  %40 = vmatprep.subr.mxu0 0.0
  %41 = vmatpush1.msra.mxu0 0.0
  %42 = vmatprep.subr.mxu0 0.0
  %43 = vmatpush1.msra.mxu0 0.0
  %44 = vmatprep.subr.mxu0 0.0
  %45 = vmatpush1.msra.mxu0 0.0
  %46 = vmatprep.subr.mxu0 0.0
  %47 = vmatpush1.msra.mxu0 0.0
  %48 = vmatprep.subr.mxu0 0.0
  %49 = vmatpush1.msra.mxu0 0.0
  %50 = vmatprep.subr.mxu0 0.0
  %51 = vmatpush1.msra.mxu0 0.0
  %52 = vmatprep.subr.mxu0 0.0
  %53 = vmatpush1.msra.mxu0 0.0
  %54 = vmatprep.subr.mxu0 0.0
  %55 = vmatpush1.msra.mxu0 0.0
  %56 = vmatprep.subr.mxu0 0.0
  %57 = vmatpush1.msra.mxu0 0.0
  %58 = vmatprep.subr.mxu0 0.0
  %59 = vmatpush1.msra.mxu0 0.0
  %60 = vmatprep.subr.mxu0 0.0
  %61 = vmatpush1.msra.mxu0 0.0
  %62 = vmatprep.subr.mxu0 0.0
  %63 = vmatpush1.msra.mxu0 0.0
  %64 = vmatprep.subr.mxu0 0.0
  %65 = vmatpush1.msra.mxu0 0.0
  %66 = vmatprep.subr.mxu0 0.0
  %67 = vmatpush1.msra.mxu0 0.0
  %68 = vmatprep.subr.mxu0 0.0
  %69 = vmatpush1.msra.mxu0 0.0
  %70 = vmatprep.subr.mxu0 0.0
  %71 = vmatpush1.msra.mxu0 0.0
  %72 = vmatprep.subr.mxu0 0.0
  %73 = vmatpush1.msra.mxu0 0.0
  %74 = vmatprep.subr.mxu0 0.0
  %75 = vmatpush1.msra.mxu0 0.0
  %76 = vmatprep.subr.mxu0 0.0
  %77 = vmatpush1.msra.mxu0 0.0
  %78 = vmatprep.subr.mxu0 0.0
  %79 = vmatpush1.msra.mxu0 0.0
  %80 = vmatprep.subr.mxu0 0.0
  %81 = vmatpush1.msra.mxu0 0.0
  %82 = vmatprep.subr.mxu0 0.0
  %83 = vmatpush1.msra.mxu0 0.0
  %84 = vmatprep.subr.mxu0 0.0
  %85 = vmatpush1.msra.mxu0 0.0
  %86 = vmatprep.subr.mxu0 0.0
  %87 = vmatpush1.msra.mxu0 0.0
  %88 = vmatprep.mubr.f32.mxu0 0.0
  %89 = vmatmul.mubr.f32.gmra.mrb[0].mxu0 %v18
  %v90 = vpop.f32.mrb[0].mxu0
  %v91 = vadd.f32 0.0, %v90
  %v92 = vpop.f32.mrb[0].mxu0
  %93 = vdwg.mxu0
  %vm94 = vcmp.gt.f32.partialorder %v91, 0.0
  %v95 = vmul.f32 %v91, 0.01
  %v96 = vsel %vm94, %v91, %v95
  %vm97 = vcmask 64512
  %v99 = vsel %vm97, %v12, 0
  %101 = vmatprep.subr.mxu0 0.0
  %102 = vmatpush1.msra.mxu0 %v96
  %103 = vmatprep.subr.mxu0 0.0
  %104 = vmatpush1.msra.mxu0 0.0
  %105 = vmatprep.subr.mxu0 0.0
  %106 = vmatpush1.msra.mxu0 0.0
  %107 = vmatprep.subr.mxu0 0.0
  %108 = vmatpush1.msra.mxu0 0.0
  %109 = vmatprep.subr.mxu0 0.0
  %110 = vmatpush1.msra.mxu0 0.0
  %111 = vmatprep.subr.mxu0 0.0
  %112 = vmatpush1.msra.mxu0 0.0
  %113 = vmatprep.subr.mxu0 0.0
  %114 = vmatpush1.msra.mxu0 0.0
  %115 = vmatprep.subr.mxu0 0.0
  %116 = vmatpush1.msra.mxu0 0.0
  %117 = vmatprep.subr.mxu0 0.0
  %118 = vmatpush1.msra.mxu0 0.0
  %119 = vmatprep.subr.mxu0 0.0
  %120 = vmatpush1.msra.mxu0 0.0
  %121 = vmatprep.subr.mxu0 0.0
  %122 = vmatpush1.msra.mxu0 0.0
  %123 = vmatprep.subr.mxu0 0.0
  %124 = vmatpush1.msra.mxu0 0.0
  %125 = vmatprep.subr.mxu0 0.0
  %126 = vmatpush1.msra.mxu0 0.0
  %127 = vmatprep.subr.mxu0 0.0
  %128 = vmatpush1.msra.mxu0 0.0
  %129 = vmatprep.subr.mxu0 0.0
  %130 = vmatpush1.msra.mxu0 0.0
  %131 = vmatprep.subr.mxu0 0.0
  %132 = vmatpush1.msra.mxu0 0.0
  %133 = vmatprep.subr.mxu0 0.0
  %134 = vmatpush1.msra.mxu0 0.0
  %135 = vmatprep.subr.mxu0 0.0
  %136 = vmatpush1.msra.mxu0 0.0
  %137 = vmatprep.subr.mxu0 0.0
  %138 = vmatpush1.msra.mxu0 0.0
  %139 = vmatprep.subr.mxu0 0.0
  %140 = vmatpush1.msra.mxu0 0.0
  %141 = vmatprep.subr.mxu0 0.0
  %142 = vmatpush1.msra.mxu0 0.0
  %143 = vmatprep.subr.mxu0 0.0
  %144 = vmatpush1.msra.mxu0 0.0
  %145 = vmatprep.subr.mxu0 0.0
  %146 = vmatpush1.msra.mxu0 0.0
  %147 = vmatprep.subr.mxu0 0.0
  %148 = vmatpush1.msra.mxu0 0.0
  %149 = vmatprep.subr.mxu0 0.0
  %150 = vmatpush1.msra.mxu0 0.0
  %151 = vmatprep.subr.mxu0 0.0
  %152 = vmatpush1.msra.mxu0 0.0
  %153 = vmatprep.subr.mxu0 0.0
  %154 = vmatpush1.msra.mxu0 0.0
  %155 = vmatprep.subr.mxu0 0.0
  %156 = vmatpush1.msra.mxu0 0.0
  %157 = vmatprep.subr.mxu0 0.0
  %158 = vmatpush1.msra.mxu0 0.0
  %159 = vmatprep.subr.mxu0 0.0
  %160 = vmatpush1.msra.mxu0 0.0
  %161 = vmatprep.subr.mxu0 0.0
  %162 = vmatpush1.msra.mxu0 0.0
  %163 = vmatprep.subr.mxu0 0.0
  %164 = vmatpush1.msra.mxu0 0.0
  %165 = vmatprep.mubr.f32.mxu0 0.0
  %166 = vmatmul.mubr.f32.gmra.mrb[0].mxu0 %v99
  %v167 = vpop.f32.mrb[0].mxu0
  %v168 = vadd.f32 0.0, %v167
  %v169 = vpop.f32.mrb[0].mxu0
  %170 = vdwg.mxu0
  %vm171 = vcmp.gt.f32.partialorder %v168, 0.0
  %v172 = vmul.f32 %v168, 0.01
  %v173 = vsel %vm171, %v168, %v172
  %v175 = vsel %vm97, %v13, 0
  %177 = vmatprep.subr.mxu0 0.0
  %178 = vmatpush1.msra.mxu0 %v173
  %179 = vmatprep.subr.mxu0 0.0
  %180 = vmatpush1.msra.mxu0 0.0
  %181 = vmatprep.subr.mxu0 0.0
  %182 = vmatpush1.msra.mxu0 0.0
  %183 = vmatprep.subr.mxu0 0.0
  %184 = vmatpush1.msra.mxu0 0.0
  %185 = vmatprep.subr.mxu0 0.0
  %186 = vmatpush1.msra.mxu0 0.0
  %187 = vmatprep.subr.mxu0 0.0
  %188 = vmatpush1.msra.mxu0 0.0
  %189 = vmatprep.subr.mxu0 0.0
  %190 = vmatpush1.msra.mxu0 0.0
  %191 = vmatprep.subr.mxu0 0.0
  %192 = vmatpush1.msra.mxu0 0.0
  %193 = vmatprep.subr.mxu0 0.0
  %194 = vmatpush1.msra.mxu0 0.0
  %195 = vmatprep.subr.mxu0 0.0
  %196 = vmatpush1.msra.mxu0 0.0
  %197 = vmatprep.subr.mxu0 0.0
  %198 = vmatpush1.msra.mxu0 0.0
  %199 = vmatprep.subr.mxu0 0.0
  %200 = vmatpush1.msra.mxu0 0.0
  %201 = vmatprep.subr.mxu0 0.0
  %202 = vmatpush1.msra.mxu0 0.0
  %203 = vmatprep.subr.mxu0 0.0
  %204 = vmatpush1.msra.mxu0 0.0
  %205 = vmatprep.subr.mxu0 0.0
  %206 = vmatpush1.msra.mxu0 0.0
  %207 = vmatprep.subr.mxu0 0.0
  %208 = vmatpush1.msra.mxu0 0.0
  %209 = vmatprep.subr.mxu0 0.0
  %210 = vmatpush1.msra.mxu0 0.0
  %211 = vmatprep.subr.mxu0 0.0
  %212 = vmatpush1.msra.mxu0 0.0
  %213 = vmatprep.subr.mxu0 0.0
  %214 = vmatpush1.msra.mxu0 0.0
  %215 = vmatprep.subr.mxu0 0.0
  %216 = vmatpush1.msra.mxu0 0.0
  %217 = vmatprep.subr.mxu0 0.0
  %218 = vmatpush1.msra.mxu0 0.0
  %219 = vmatprep.subr.mxu0 0.0
  %220 = vmatpush1.msra.mxu0 0.0
  %221 = vmatprep.subr.mxu0 0.0
  %222 = vmatpush1.msra.mxu0 0.0
  %223 = vmatprep.subr.mxu0 0.0
  %224 = vmatpush1.msra.mxu0 0.0
  %225 = vmatprep.subr.mxu0 0.0
  %226 = vmatpush1.msra.mxu0 0.0
  %227 = vmatprep.subr.mxu0 0.0
  %228 = vmatpush1.msra.mxu0 0.0
  %229 = vmatprep.subr.mxu0 0.0
  %230 = vmatpush1.msra.mxu0 0.0
  %231 = vmatprep.subr.mxu0 0.0
  %232 = vmatpush1.msra.mxu0 0.0
  %233 = vmatprep.subr.mxu0 0.0
  %234 = vmatpush1.msra.mxu0 0.0
  %235 = vmatprep.subr.mxu0 0.0
  %236 = vmatpush1.msra.mxu0 0.0
  %237 = vmatprep.subr.mxu0 0.0
  %238 = vmatpush1.msra.mxu0 0.0
  %239 = vmatprep.subr.mxu0 0.0
  %240 = vmatpush1.msra.mxu0 0.0
  %241 = vmatprep.mubr.f32.mxu0 0.0
  %242 = vmatmul.mubr.f32.gmra.mrb[0].mxu0 %v175
  %v243 = vpop.f32.mrb[0].mxu0
  %v244 = vadd.f32 0.0, %v243
  %v245 = vpop.f32.mrb[0].mxu0
  %246 = vdwg.mxu0
  %vm247 = vcmp.gt.f32.partialorder %v244, 0.0
  %v248 = vmul.f32 %v244, 0.01
  %v249 = vsel %vm247, %v244, %v248
  %v251 = vsel %vm97, %v14, 0
  %253 = vmatprep.subr.mxu0 0.0
  %254 = vmatpush1.msra.mxu0 %v249
  %255 = vmatprep.subr.mxu0 0.0
  %256 = vmatpush1.msra.mxu0 0.0
  %257 = vmatprep.subr.mxu0 0.0
  %258 = vmatpush1.msra.mxu0 0.0
  %259 = vmatprep.subr.mxu0 0.0
  %260 = vmatpush1.msra.mxu0 0.0
  %261 = vmatprep.subr.mxu0 0.0
  %262 = vmatpush1.msra.mxu0 0.0
  %263 = vmatprep.subr.mxu0 0.0
  %264 = vmatpush1.msra.mxu0 0.0
  %265 = vmatprep.subr.mxu0 0.0
  %266 = vmatpush1.msra.mxu0 0.0
  %267 = vmatprep.subr.mxu0 0.0
  %268 = vmatpush1.msra.mxu0 0.0
  %269 = vmatprep.subr.mxu0 0.0
  %270 = vmatpush1.msra.mxu0 0.0
  %271 = vmatprep.subr.mxu0 0.0
  %272 = vmatpush1.msra.mxu0 0.0
  %273 = vmatprep.subr.mxu0 0.0
  %274 = vmatpush1.msra.mxu0 0.0
  %275 = vmatprep.subr.mxu0 0.0
  %276 = vmatpush1.msra.mxu0 0.0
  %277 = vmatprep.subr.mxu0 0.0
  %278 = vmatpush1.msra.mxu0 0.0
  %279 = vmatprep.subr.mxu0 0.0
  %280 = vmatpush1.msra.mxu0 0.0
  %281 = vmatprep.subr.mxu0 0.0
  %282 = vmatpush1.msra.mxu0 0.0
  %283 = vmatprep.subr.mxu0 0.0
  %284 = vmatpush1.msra.mxu0 0.0
  %285 = vmatprep.subr.mxu0 0.0
  %286 = vmatpush1.msra.mxu0 0.0
  %287 = vmatprep.subr.mxu0 0.0
  %288 = vmatpush1.msra.mxu0 0.0
  %289 = vmatprep.subr.mxu0 0.0
  %290 = vmatpush1.msra.mxu0 0.0
  %291 = vmatprep.subr.mxu0 0.0
  %292 = vmatpush1.msra.mxu0 0.0
  %293 = vmatprep.subr.mxu0 0.0
  %294 = vmatpush1.msra.mxu0 0.0
  %295 = vmatprep.subr.mxu0 0.0
  %296 = vmatpush1.msra.mxu0 0.0
  %297 = vmatprep.subr.mxu0 0.0
  %298 = vmatpush1.msra.mxu0 0.0
  %299 = vmatprep.subr.mxu0 0.0
  %300 = vmatpush1.msra.mxu0 0.0
  %301 = vmatprep.subr.mxu0 0.0
  %302 = vmatpush1.msra.mxu0 0.0
  %303 = vmatprep.subr.mxu0 0.0
  %304 = vmatpush1.msra.mxu0 0.0
  %305 = vmatprep.subr.mxu0 0.0
  %306 = vmatpush1.msra.mxu0 0.0
  %307 = vmatprep.subr.mxu0 0.0
  %308 = vmatpush1.msra.mxu0 0.0
  %309 = vmatprep.subr.mxu0 0.0
  %310 = vmatpush1.msra.mxu0 0.0
  %311 = vmatprep.subr.mxu0 0.0
  %312 = vmatpush1.msra.mxu0 0.0
  %313 = vmatprep.subr.mxu0 0.0
  %314 = vmatpush1.msra.mxu0 0.0
  %315 = vmatprep.subr.mxu0 0.0
  %316 = vmatpush1.msra.mxu0 0.0
  %317 = vmatprep.mubr.f32.mxu0 0.0
  %318 = vmatmul.mubr.f32.gmra.mrb[0].mxu0 %v251
  %v319 = vpop.f32.mrb[0].mxu0
  %v320 = vadd.f32 0.0, %v319
  %v321 = vpop.f32.mrb[0].mxu0
  %322 = vdwg.mxu0
  %vm323 = vcmp.gt.f32.partialorder %v320, 0.0
  %v324 = vmul.f32 %v320, 0.01
  %v325 = vsel %vm323, %v320, %v324
  %326 = vst [vmem:[%s2] sm:$0x3] %v325
  // Predicated region
  $region10: #{net_forward.1} parent=0 // pred_check
    _
  $region11: #{net_forward.1} parent=0 // pred_check_branch
    %328 = sbr.rel (0) target = $region13
  $region12: #{net_forward.1} parent=0 // pred_region
    _
  $region13: #{net_forward.1} parent=0 // pred_fallthru
    _
  // Predicated region
  $region14: #{net_forward.1} parent=0 // pred_check
    _
  $region15: #{net_forward.1} parent=0 // pred_check_branch
    %330 = sbr.rel (0) target = $region17
  $region16: #{net_forward.1} parent=0 // pred_region
    _
  $region17: #{net_forward.1} parent=0 // pred_fallthru
    _

</llo_original>
